<compile_context>
chip_gen: v7x
topology: tpu7x:2x2x1
jax: 0.10.0
libtpu: 0.0.40
codegen_flags: <defaults>
</compile_context>

<pallas_src>
import jax
import jax.numpy as jnp
from jax.experimental import pallas as pl
from jax.experimental.pallas import tpu as pltpu


def _round_up(n, m):
    return ((n + m - 1) // m) * m


def _choose_tb(B):
    """Batch tile: big tiles (amortize per-step overhead), >=2 steps for megacore
    when the batch is large, TB rounded to a sublane multiple (x stays f32 in VMEM)."""
    cap = 1024
    if B > cap:
        n_steps = -(-B // cap)
    elif B >= 512:
        n_steps = 2          # >= 2 grid steps so v7x's two TensorCores both get work
    else:
        n_steps = 1
    return max(8, _round_up(-(-B // n_steps), 8))


def policy_net_kernel(x_ref, w1_ref, b1_ref, w2_ref, b2_ref, out_ref):
    # fc1: in-kernel bf16 cast of x, bf16 MXU matmul, f32 accumulation, ReLU in f32.
    x = x_ref[...].astype(jnp.bfloat16)                                   # [TB, S]
    h = jnp.dot(x, w1_ref[...], preferred_element_type=jnp.float32) + b1_ref[...]
    h = jnp.maximum(h, 0.0)                                               # [TB, H_pad] f32

    # fc2: bf16 MXU matmul, f32 accumulation.  Padded H rows of w2 are zero -> no effect.
    logits = (
        jnp.dot(h.astype(jnp.bfloat16), w2_ref[...],
                preferred_element_type=jnp.float32)
        + b2_ref[...]
    )                                                                     # [TB, A] f32

    # Numerically stable softmax over dim=1 with an EXACT divide (rows sum to 1).
    m = jnp.max(logits, axis=1, keepdims=True)
    e = jnp.exp(logits - m)
    denom = jnp.sum(e, axis=1, keepdims=True)
    out_ref[...] = (e / denom).astype(out_ref.dtype)


def prepare_params(w1, b1, w2, b2):
    """One-time parameter prep (hoisted out of the per-step forward):
    bf16 MXU operands, hidden dim padded to 128 lanes (pad cols/rows are zero)."""
    S, H = w1.shape
    A = w2.shape[1]
    H_pad = _round_up(H, 128)
    w1_p = jnp.zeros((S, H_pad), jnp.bfloat16).at[:, :H].set(w1.astype(jnp.bfloat16))
    b1_p = jnp.zeros((1, H_pad), jnp.float32).at[:, :H].set(b1.astype(jnp.float32))
    w2_p = jnp.zeros((H_pad, A), jnp.bfloat16).at[:H, :].set(w2.astype(jnp.bfloat16))
    b2_p = b2.astype(jnp.float32).reshape(1, A)
    return w1_p, b1_p, w2_p, b2_p


def policy_net_forward(x, params):
    """x: [B, state_dim] f32; params from prepare_params -> action probs [B, A] f32."""
    w1_p, b1_p, w2_p, b2_p = params
    B, S = x.shape
    H_pad = w1_p.shape[1]
    A = w2_p.shape[1]

    TB = _choose_tb(B)
    grid = (pl.cdiv(B, TB),)

    cost = pl.CostEstimate(
        flops=2 * B * (S * H_pad + H_pad * A),
        transcendentals=B * A,                      # exp
        bytes_accessed=(x.size * 4 + w1_p.size * 2 + w2_p.size * 2
                        + b1_p.size * 4 + b2_p.size * 4 + B * A * 4),
    )

    return pl.pallas_call(
        policy_net_kernel,
        out_shape=jax.ShapeDtypeStruct((B, A), jnp.float32),
        grid=grid,
        in_specs=[
            pl.BlockSpec((TB, S), lambda i: (i, 0)),        # x: streamed per batch tile
            pl.BlockSpec((S, H_pad), lambda i: (0, 0)),     # weights stay VMEM-resident
            pl.BlockSpec((1, H_pad), lambda i: (0, 0)),
            pl.BlockSpec((H_pad, A), lambda i: (0, 0)),
            pl.BlockSpec((1, A), lambda i: (0, 0)),
        ],
        out_specs=pl.BlockSpec((TB, A), lambda i: (i, 0)),  # unpadded probs writeback
        compiler_params=pltpu.CompilerParams(
            dimension_semantics=("parallel",),              # megacore sharding on v7x
        ),
        cost_estimate=cost,
    )(x, w1_p, b1_p, w2_p, b2_p)


def init_params(key, state_dim, action_num, hidden_dim):
    # Deterministic synthetic init (mimics nn.Linear uniform(-1/sqrt(fan_in), 1/sqrt(fan_in))).
    k1, k2, k3, k4 = jax.random.split(key, 4)
    lim1 = 1.0 / jnp.sqrt(state_dim)
    lim2 = 1.0 / jnp.sqrt(hidden_dim)
    w1 = jax.random.uniform(k1, (state_dim, hidden_dim), jnp.float32, -lim1, lim1)
    b1 = jax.random.uniform(k2, (1, hidden_dim), jnp.float32, -lim1, lim1)
    w2 = jax.random.uniform(k3, (hidden_dim, action_num), jnp.float32, -lim2, lim2)
    b2 = jax.random.uniform(k4, (1, action_num), jnp.float32, -lim2, lim2)
    return w1, b1, w2, b2


if __name__ == "__main__":
    batch, state_dim, action_num, hidden_dim = 8, 16, 4, 32

    key = jax.random.PRNGKey(0)
    kx, kp = jax.random.split(key)
    x = jax.random.normal(kx, (batch, state_dim), jnp.float32)
    w1, b1, w2, b2 = init_params(kp, state_dim, action_num, hidden_dim)

    params = prepare_params(w1, b1, w2, b2)          # one-time prep, not per forward
    probs = policy_net_forward(x, params)
    probs = jax.block_until_ready(probs)

    # Reference matched to the kernel's numerics (bf16 MXU operands, f32 accum/elementwise).
    xb = x.astype(jnp.bfloat16).astype(jnp.float32)
    w1b = w1.astype(jnp.bfloat16).astype(jnp.float32)
    w2b = w2.astype(jnp.bfloat16).astype(jnp.float32)
    h_ref = jnp.maximum(xb @ w1b + b1, 0.0)
    h_ref = h_ref.astype(jnp.bfloat16).astype(jnp.float32)
    ref = jax.nn.softmax(h_ref @ w2b + b2, axis=1)

    assert probs.shape == (batch, action_num)
    assert jnp.allclose(jnp.sum(probs, axis=1), 1.0, atol=1e-4)
    assert jnp.allclose(probs, ref, atol=2e-3)

    # TODO(synk): Categorical sampling / saved_log_probs bookkeeping lives in the agent's
    # training loop, not in this forward pass.
    print("KERNEL_OK")
</pallas_src>

<mosaic_0001>
module attributes {stable_mosaic.version = 11 : i64} {
  func.func @policy_net_kernel(%arg0: i32, %arg1: memref<8x16xf32, #tpu.memory_space<vmem>>, %arg2: memref<16x128xbf16, #tpu.memory_space<vmem>>, %arg3: memref<1x128xf32, #tpu.memory_space<vmem>>, %arg4: memref<128x4xbf16, #tpu.memory_space<vmem>>, %arg5: memref<1x4xf32, #tpu.memory_space<vmem>>, %arg6: memref<8x4xf32, #tpu.memory_space<vmem>>) attributes {dimension_semantics = [#tpu.dimension_semantics<parallel>], iteration_bounds = array<i64: 1>, scalar_prefetch = 0 : i64, scratch_operands = 0 : i64, tpu.core_type = #tpu.core_type<tc>, window_params = [{transform_indices = @transform_0, window_bounds = array<i64: 8, 16>}, {pipeline_mode = #tpu.pipeline_mode<synchronous>, transform_indices = @transform_1, window_bounds = array<i64: 16, 128>}, {pipeline_mode = #tpu.pipeline_mode<synchronous>, transform_indices = @transform_2, window_bounds = array<i64: 1, 128>}, {pipeline_mode = #tpu.pipeline_mode<synchronous>, transform_indices = @transform_3, window_bounds = array<i64: 128, 4>}, {pipeline_mode = #tpu.pipeline_mode<synchronous>, transform_indices = @transform_4, window_bounds = array<i64: 1, 4>}, {transform_indices = @transform_5, window_bounds = array<i64: 8, 4>}]} {
    %c0 = arith.constant 0 : index
    %c0_0 = arith.constant 0 : index
    %0 = vector.load %arg1[%c0, %c0_0] : memref<8x16xf32, #tpu.memory_space<vmem>>, vector<8x16xf32>
    %1 = arith.truncf %0 : vector<8x16xf32> to vector<8x16xbf16>
    %c0_1 = arith.constant 0 : index
    %c0_2 = arith.constant 0 : index
    %2 = vector.load %arg2[%c0_1, %c0_2] : memref<16x128xbf16, #tpu.memory_space<vmem>>, vector<16x128xbf16>
    %cst = arith.constant dense<0.000000e+00> : vector<8x128xf32>
    %3 = tpu.matmul %1, %2, %cst {dimension_numbers = #tpu.dot_dimension_numbers<[1], [0], [0], [1], [0, 0, 1, 1], [], []>} : vector<8x16xbf16>, vector<16x128xbf16>, vector<8x128xf32> -> vector<8x128xf32>
    %c0_3 = arith.constant 0 : index
    %c0_4 = arith.constant 0 : index
    %4 = vector.load %arg3[%c0_3, %c0_4] : memref<1x128xf32, #tpu.memory_space<vmem>>, vector<1x128xf32>
    %5 = vector.broadcast %4 : vector<1x128xf32> to vector<8x128xf32>
    %6 = arith.addf %3, %5 : vector<8x128xf32>
    %cst_5 = arith.constant 0.000000e+00 : f32
    %7 = vector.broadcast %cst_5 : f32 to vector<8x128xf32>
    %8 = arith.maximumf %6, %7 : vector<8x128xf32>
    %9 = arith.truncf %8 : vector<8x128xf32> to vector<8x128xbf16>
    %c0_6 = arith.constant 0 : index
    %c0_7 = arith.constant 0 : index
    %10 = vector.load %arg4[%c0_6, %c0_7] : memref<128x4xbf16, #tpu.memory_space<vmem>>, vector<128x4xbf16>
    %cst_8 = arith.constant dense<0.000000e+00> : vector<8x4xf32>
    %11 = tpu.matmul %9, %10, %cst_8 {dimension_numbers = #tpu.dot_dimension_numbers<[1], [0], [0], [1], [0, 0, 1, 1], [], []>} : vector<8x128xbf16>, vector<128x4xbf16>, vector<8x4xf32> -> vector<8x4xf32>
    %c0_9 = arith.constant 0 : index
    %c0_10 = arith.constant 0 : index
    %12 = vector.load %arg5[%c0_9, %c0_10] : memref<1x4xf32, #tpu.memory_space<vmem>>, vector<1x4xf32>
    %13 = vector.broadcast %12 : vector<1x4xf32> to vector<8x4xf32>
    %14 = arith.addf %11, %13 : vector<8x4xf32>
    %cst_11 = arith.constant dense<0xFF800000> : vector<8xf32>
    %15 = vector.multi_reduction <maximumf>, %14, %cst_11 [1] : vector<8x4xf32> to vector<8xf32>
    %16 = vector.shape_cast %15 : vector<8xf32> to vector<8x1xf32>
    %17 = vector.broadcast %16 : vector<8x1xf32> to vector<8x4xf32>
    %18 = arith.subf %14, %17 : vector<8x4xf32>
    %19 = math.exp %18 : vector<8x4xf32>
    %cst_12 = arith.constant dense<0.000000e+00> : vector<8xf32>
    %20 = vector.multi_reduction <add>, %19, %cst_12 [1] : vector<8x4xf32> to vector<8xf32>
    %21 = vector.shape_cast %20 : vector<8xf32> to vector<8x1xf32>
    %22 = vector.broadcast %21 : vector<8x1xf32> to vector<8x4xf32>
    %23 = arith.divf %19, %22 : vector<8x4xf32>
    %c0_13 = arith.constant 0 : index
    %c0_14 = arith.constant 0 : index
    %24 = vector.load %arg6[%c0_13, %c0_14] : memref<8x4xf32, #tpu.memory_space<vmem>>, vector<8x4xf32>
    tpu.vector_store %arg6[%c0_13, %c0_14], %23 {strides = array<i32>} : memref<8x4xf32, #tpu.memory_space<vmem>>, vector<8x4xf32>,
    return
  }
  func.func @transform_0(%arg0: i32) -> (i32, i32) {
    %c0_i32 = arith.constant 0 : i32
    %c0_i32_0 = arith.constant 0 : i32
    return %arg0, %c0_i32 : i32, i32
  }
  func.func @transform_1(%arg0: i32) -> (i32, i32) {
    %c0_i32 = arith.constant 0 : i32
    %c0_i32_0 = arith.constant 0 : i32
    %c0_i32_1 = arith.constant 0 : i32
    return %c0_i32, %c0_i32_0 : i32, i32
  }
  func.func @transform_2(%arg0: i32) -> (i32, i32) {
    %c0_i32 = arith.constant 0 : i32
    %c0_i32_0 = arith.constant 0 : i32
    %c0_i32_1 = arith.constant 0 : i32
    return %c0_i32, %c0_i32_0 : i32, i32
  }
  func.func @transform_3(%arg0: i32) -> (i32, i32) {
    %c0_i32 = arith.constant 0 : i32
    %c0_i32_0 = arith.constant 0 : i32
    %c0_i32_1 = arith.constant 0 : i32
    return %c0_i32, %c0_i32_0 : i32, i32
  }
  func.func @transform_4(%arg0: i32) -> (i32, i32) {
    %c0_i32 = arith.constant 0 : i32
    %c0_i32_0 = arith.constant 0 : i32
    %c0_i32_1 = arith.constant 0 : i32
    return %c0_i32, %c0_i32_0 : i32, i32
  }
  func.func @transform_5(%arg0: i32) -> (i32, i32) {
    %c0_i32 = arith.constant 0 : i32
    %c0_i32_0 = arith.constant 0 : i32
    return %arg0, %c0_i32 : i32, i32
  }
}

</mosaic_0001>

<llo_original>
// kernel: tpu_custom_call.1
$region0: #{tpu_custom_call.1}
  #allocation0 [shape = 'u32[]', space=smem, size = 0x4, offset = 0x4, fixed_abs, tag = 'smem constant byte address 0x4 - core index']
  #allocation1 [shape = 'u32[144,128]{1,0:T(1,128)}', space=vmem, size = 0x12000, scoped, tag = 'internal scratch']
  %s0 = inlined_call_operand.vmem [shape: f32[8,16], index: 0, kind: input, shape index: {}]
  %s1 = inlined_call_operand.vmem [shape: bf16[16,128], index: 1, kind: input, shape index: {}]
  %s2 = inlined_call_operand.vmem [shape: f32[1,128], index: 2, kind: input, shape index: {}]
  %s3 = inlined_call_operand.vmem [shape: bf16[128,4], index: 3, kind: input, shape index: {}]
  %s4 = inlined_call_operand.vmem [shape: f32[1,4], index: 4, kind: input, shape index: {}]
  %s5 = inlined_call_operand.vmem [shape: f32[8,4], index: 5, kind: output, shape index: {}]
  %s6 = sld [smem:[#allocation0]]
  $region30: #{tpu_custom_call.1} parent=0
    _
  %s8 = ssub.s32 1, %s6
  %s9 = scalar_select 0, %s8, %s6
  // Predicated region
  $region2: #{tpu_custom_call.1} parent=0 // pred_check
    _
  $region3: #{tpu_custom_call.1} parent=0 // pred_check_branch
    %11 = sbr.rel (0) target = $region5
  $region4: #{tpu_custom_call.1} parent=0 // pred_region
    _
  $region5: #{tpu_custom_call.1} parent=0 // pred_fallthru
    _
  // Predicated region
  $region6: #{tpu_custom_call.1} parent=0 // pred_check
    _
  $region7: #{tpu_custom_call.1} parent=0 // pred_check_branch
    %13 = sbr.rel (0) target = $region9
  $region8: #{tpu_custom_call.1} parent=0 // pred_region
    _
  $region9: #{tpu_custom_call.1} parent=0 // pred_fallthru
    _
  // Predicated region
  $region10: #{tpu_custom_call.1} parent=0 // pred_check
    _
  $region11: #{tpu_custom_call.1} parent=0 // pred_check_branch
    %15 = sbr.rel (0) target = $region13
  $region12: #{tpu_custom_call.1} parent=0 // pred_region
    _
  $region13: #{tpu_custom_call.1} parent=0 // pred_fallthru
    _
  // Predicated region
  $region14: #{tpu_custom_call.1} parent=0 // pred_check
    _
  $region15: #{tpu_custom_call.1} parent=0 // pred_check_branch
    %17 = sbr.rel (0) target = $region17
  $region16: #{tpu_custom_call.1} parent=0 // pred_region
    _
  $region17: #{tpu_custom_call.1} parent=0 // pred_fallthru
    _
  // Predicated region
  $region18: #{tpu_custom_call.1} parent=0 // pred_check
    _
  $region19: #{tpu_custom_call.1} parent=0 // pred_check_branch
    %19 = sbr.rel (0) target = $region21
  $region20: #{tpu_custom_call.1} parent=0 // pred_region
    _
  $region21: #{tpu_custom_call.1} parent=0 // pred_fallthru
    _
  %v21 = vld [vmem:[%s0] sm:$0xff]
  %v22 = vpack.c.bf16 %v21, %v21
  %v23 = vld [vmem:[%s1] sm:$0xf]
  %v24 = vld [vmem:[%s1 + $0x4] sm:$0xf]
  %v25 = vld [vmem:[%s2] sm:$0x1]
  %v27 = vlaneseq
  %v28 = vshrl.u32 %v27, 7
  %v29 = vsub.s32 0, %v28
  %v30 = vrot.slane %v25, %v29
  %v34 = vunpack.c.l.b16 %v23
  %v35 = vunpack.c.l.b16 %v24
  %v36 = vpack.c.b16 %v35, %v34
  %vm38 = vcmask 130048
  %v40 = vsel %vm38, %v22, 0
  %42 = vmatprep.subr.bf16.mxu0 0
  %43 = vmatpush1.bf16.msra.mxu0 %v36
  %44 = vmatprep.subr.bf16.mxu0 0
  %45 = vmatpush1.bf16.msra.mxu0 0
  %46 = vmatprep.subr.bf16.mxu0 0
  %47 = vmatpush1.bf16.msra.mxu0 0
  %48 = vmatprep.subr.bf16.mxu0 0
  %49 = vmatpush1.bf16.msra.mxu0 0
  %50 = vmatprep.subr.bf16.mxu0 0
  %51 = vmatpush1.bf16.msra.mxu0 0
  %52 = vmatprep.subr.bf16.mxu0 0
  %53 = vmatpush1.bf16.msra.mxu0 0
  %54 = vmatprep.subr.bf16.mxu0 0
  %55 = vmatpush1.bf16.msra.mxu0 0
  %56 = vmatprep.subr.bf16.mxu0 0
  %57 = vmatpush1.bf16.msra.mxu0 0
  %58 = vmatprep.subr.bf16.mxu0 0
  %59 = vmatpush1.bf16.msra.mxu0 0
  %60 = vmatprep.subr.bf16.mxu0 0
  %61 = vmatpush1.bf16.msra.mxu0 0
  %62 = vmatprep.subr.bf16.mxu0 0
  %63 = vmatpush1.bf16.msra.mxu0 0
  %64 = vmatprep.subr.bf16.mxu0 0
  %65 = vmatpush1.bf16.msra.mxu0 0
  %66 = vmatprep.subr.bf16.mxu0 0
  %67 = vmatpush1.bf16.msra.mxu0 0
  %68 = vmatprep.subr.bf16.mxu0 0
  %69 = vmatpush1.bf16.msra.mxu0 0
  %70 = vmatprep.subr.bf16.mxu0 0
  %71 = vmatpush1.bf16.msra.mxu0 0
  %72 = vmatprep.subr.bf16.mxu0 0
  %73 = vmatpush1.bf16.msra.mxu0 0
  %74 = vmatprep.mubr.bf16.mxu0 0
  %75 = vmatmul.mubr.bf16.gmra.mrb[0].mxu0 %v40
  %v76 = vpop.f32.mrb[0].mxu0
  %v77 = vadd.f32 %v30, %v76
  %v78 = vpop.f32.mrb[0].mxu0
  %v79 = vpop.f32.mrb[0].mxu0
  %v80 = vpop.f32.mrb[0].mxu0
  %81 = vdwg.mxu0
  %v82 = vmax.f32 %v77, 0.0
  %v83 = vpack.c.bf16 %v82, %v82
  %v84 = vld [vmem:[%s3] sm:$0xf]
  %v85 = vld [vmem:[%s3 + $0x4] sm:$0xf]
  %v86 = vld [vmem:[%s3 + $0x8] sm:$0xf]
  %v87 = vld [vmem:[%s3 + $0xc] sm:$0xf]
  %v88 = vld [vmem:[%s3 + $0x10] sm:$0xf]
  %v89 = vld [vmem:[%s3 + $0x14] sm:$0xf]
  %v90 = vld [vmem:[%s3 + $0x18] sm:$0xf]
  %v91 = vld [vmem:[%s3 + $0x1c] sm:$0xf]
  %v92 = vld [vmem:[%s3 + $0x20] sm:$0xf]
  %v93 = vld [vmem:[%s3 + $0x24] sm:$0xf]
  %v94 = vld [vmem:[%s3 + $0x28] sm:$0xf]
  %v95 = vld [vmem:[%s3 + $0x2c] sm:$0xf]
  %v96 = vld [vmem:[%s3 + $0x30] sm:$0xf]
  %v97 = vld [vmem:[%s3 + $0x34] sm:$0xf]
  %v98 = vld [vmem:[%s3 + $0x38] sm:$0xf]
  %v99 = vld [vmem:[%s3 + $0x3c] sm:$0xf]
  %v100 = vld [vmem:[%s4] sm:$0x1]
  %v102 = vlaneseq
  %v103 = vshrl.u32 %v102, 7
  %v104 = vsub.s32 0, %v103
  %v105 = vrot.slane %v100, %v104
  %v123 = vunpack.c.l.b16 %v84
  %v124 = vunpack.c.l.b16 %v85
  %v125 = vunpack.c.l.b16 %v86
  %v126 = vunpack.c.l.b16 %v87
  %v127 = vunpack.c.l.b16 %v88
  %v128 = vunpack.c.l.b16 %v89
  %v129 = vunpack.c.l.b16 %v90
  %v130 = vunpack.c.l.b16 %v91
  %v131 = vunpack.c.l.b16 %v92
  %v132 = vunpack.c.l.b16 %v93
  %v133 = vunpack.c.l.b16 %v94
  %v134 = vunpack.c.l.b16 %v95
  %v135 = vunpack.c.l.b16 %v96
  %v136 = vunpack.c.l.b16 %v97
  %v137 = vunpack.c.l.b16 %v98
  %v138 = vunpack.c.l.b16 %v99
  %v139 = vpack.c.b16 %v124, %v123
  %v140 = vpack.c.b16 %v126, %v125
  %v141 = vpack.c.b16 %v128, %v127
  %v142 = vpack.c.b16 %v130, %v129
  %v143 = vpack.c.b16 %v132, %v131
  %v144 = vpack.c.b16 %v134, %v133
  %v145 = vpack.c.b16 %v136, %v135
  %v146 = vpack.c.b16 %v138, %v137
  %155 = vmatprep.subr.bf16.mxu0 0
  %156 = vmatpush1.bf16.msra.mxu0 %v139
  %157 = vmatprep.subr.bf16.mxu0 0
  %158 = vmatpush1.bf16.msra.mxu0 %v140
  %159 = vmatprep.subr.bf16.mxu0 0
  %160 = vmatpush1.bf16.msra.mxu0 %v141
  %161 = vmatprep.subr.bf16.mxu0 0
  %162 = vmatpush1.bf16.msra.mxu0 %v142
  %163 = vmatprep.subr.bf16.mxu0 0
  %164 = vmatpush1.bf16.msra.mxu0 %v143
  %165 = vmatprep.subr.bf16.mxu0 0
  %166 = vmatpush1.bf16.msra.mxu0 %v144
  %167 = vmatprep.subr.bf16.mxu0 0
  %168 = vmatpush1.bf16.msra.mxu0 %v145
  %169 = vmatprep.subr.bf16.mxu0 0
  %170 = vmatpush1.bf16.msra.mxu0 %v146
  %171 = vmatprep.subr.bf16.mxu0 0
  %172 = vmatpush1.bf16.msra.mxu0 0
  %173 = vmatprep.subr.bf16.mxu0 0
  %174 = vmatpush1.bf16.msra.mxu0 0
  %175 = vmatprep.subr.bf16.mxu0 0
  %176 = vmatpush1.bf16.msra.mxu0 0
  %177 = vmatprep.subr.bf16.mxu0 0
  %178 = vmatpush1.bf16.msra.mxu0 0
  %179 = vmatprep.subr.bf16.mxu0 0
  %180 = vmatpush1.bf16.msra.mxu0 0
  %181 = vmatprep.subr.bf16.mxu0 0
  %182 = vmatpush1.bf16.msra.mxu0 0
  %183 = vmatprep.subr.bf16.mxu0 0
  %184 = vmatpush1.bf16.msra.mxu0 0
  %185 = vmatprep.subr.bf16.mxu0 0
  %186 = vmatpush1.bf16.msra.mxu0 0
  %187 = vmatprep.mubr.bf16.mxu0 0
  %188 = vmatmul.mubr.bf16.gmra.mrb[0].mxu0 %v83
  %v189 = vpop.f32.mrb[0].mxu0
  %v190 = vadd.f32 %v105, %v189
  %v191 = vpop.f32.mrb[0].mxu0
  %v192 = vpop.f32.mrb[0].mxu0
  %v193 = vpop.f32.mrb[0].mxu0
  %194 = vdwg.mxu0
  %vm195 = vcmask 31744
  %v196 = vsel %vm195, %v190, -inf
  %197 = vmax.xlane.f32.xlu0 %v196
  %v198 = vpop.xlane.xlu0 %197
  %v199 = vsub.f32 %v190, %v198
  %v200 = vmul.f32 %v199, 1.442695
  %v201 = vpow.pop %v200
  %v202 = vsel %vm195, %v201, 0.0
  %203 = vadd.xlane.f32.xlu0 %v202
  %v204 = vpop.xlane.xlu0 %203
  %v205 = vrcp.pop %v204
  %v206 = vmul.f32 %v201, %v205
  %207 = vst.msk [vmem:[%s5] sm:$0xff] %vm195, %v206
  // Predicated region
  $region22: #{tpu_custom_call.1} parent=0 // pred_check
    _
  $region23: #{tpu_custom_call.1} parent=0 // pred_check_branch
    %209 = sbr.rel (0) target = $region25
  $region24: #{tpu_custom_call.1} parent=0 // pred_region
    _
  $region25: #{tpu_custom_call.1} parent=0 // pred_fallthru
    _
  // Predicated region
  $region26: #{tpu_custom_call.1} parent=0 // pred_check
    _
  $region27: #{tpu_custom_call.1} parent=0 // pred_check_branch
    %211 = sbr.rel (0) target = $region29
  $region28: #{tpu_custom_call.1} parent=0 // pred_region
    _
  $region29: #{tpu_custom_call.1} parent=0 // pred_fallthru
    _

</llo_original>
